<compile_context>
chip_gen: v7x
topology: tpu7x:2x2x1
jax: 0.10.0
libtpu: 0.0.40
codegen_flags: <defaults>
</compile_context>

<pallas_src>
import jax
import jax.numpy as jnp
from jax import lax
from jax.experimental import pallas as pl
from jax.experimental.pallas import tpu as pltpu

BN_EPS = 1e-5
LANES = 128
_SINGLE_BLOCK_MAX_BYTES = 12 << 20     # max x-slab bytes for the 1-block path
_DEFAULT_TILE_ROWS = 512               # (512,128) f32 tiles for the tiled path


# --------------------------------------------------------------------------
# Kernels
# --------------------------------------------------------------------------
def _fused_kernel(sc_ref, x_ref, o_ref):
    """Single-block fused forward.

    sc_ref (SMEM f32[13]):
      [0]a0 [1]c0   folded fc1+conv1 affine
      [2]a1 [3]c1   layer1.conv affine
      [4]w2 [5]b2   layer2.conv affine
      [6]g1 [7]be1  layer1.bn gamma/beta
      [8]g2 [9]be2  layer2.bn gamma/beta
      [10]n  [11]npad  true batch size / number of zero-padded elements
      [12]pilot1    value of element 0 after pass 2 (variance pilot shift)
    x_ref / o_ref: (rows, 128) f32 lane-dense slab; aliased in HBM.
    """
    a0 = sc_ref[0]
    c0 = sc_ref[1]
    a1 = sc_ref[2]
    c1 = sc_ref[3]
    w2 = sc_ref[4]
    b2 = sc_ref[5]
    g1 = sc_ref[6]
    be1 = sc_ref[7]
    g2 = sc_ref[8]
    be2 = sc_ref[9]
    inv_n = 1.0 / sc_ref[10]
    npad = sc_ref[11]
    pilot1 = sc_ref[12]

    # pass 1: fc1+conv1 (folded) + relu ; pass 2: layer1.conv + relu
    y = jnp.maximum(x_ref[...] * a0 + c0, 0.0)
    y = jnp.maximum(y * a1 + c1, 0.0)
    o_ref[...] = y                           # stage pass-2 result in the out slab

    # ---- layer1 BatchNorm stats: single pass, pilot-shifted, per-lane partials
    d = o_ref[...] - pilot1
    s = jnp.sum(jnp.sum(d, axis=0))
    ss = jnp.sum(jnp.sum(d * d, axis=0))
    # analytic padding correction: padded lanes (x == 0) all equal k1 here
    k1 = jnp.maximum(jnp.maximum(c0, 0.0) * a1 + c1, 0.0)
    dk1 = k1 - pilot1
    s = s - npad * dk1
    ss = ss - npad * dk1 * dk1
    mean1 = pilot1 + s * inv_n
    var1 = jnp.maximum(ss * inv_n - (s * inv_n) * (s * inv_n), 0.0)
    scale1 = g1 * lax.rsqrt(var1 + BN_EPS)
    shift1 = be1 - mean1 * scale1
    # fold BN1 affine into layer2.conv affine
    a2 = scale1 * w2
    c2 = shift1 * w2 + b2
    pilot2 = jnp.maximum(pilot1 * a2 + c2, 0.0)

    # pass 3: (BN1 + layer2.conv) + relu, in place
    o_ref[...] = jnp.maximum(o_ref[...] * a2 + c2, 0.0)

    # ---- layer2 BatchNorm stats
    d = o_ref[...] - pilot2
    s = jnp.sum(jnp.sum(d, axis=0))
    ss = jnp.sum(jnp.sum(d * d, axis=0))
    k2 = jnp.maximum(k1 * a2 + c2, 0.0)
    dk2 = k2 - pilot2
    s = s - npad * dk2
    ss = ss - npad * dk2 * dk2
    mean2 = pilot2 + s * inv_n
    var2 = jnp.maximum(ss * inv_n - (s * inv_n) * (s * inv_n), 0.0)
    scale2 = g2 * lax.rsqrt(var2 + BN_EPS)
    shift2 = be2 - mean2 * scale2

    # pass 4: BN2 affine, in place (lane-dense unmasked store)
    o_ref[...] = o_ref[...] * scale2 + shift2


def _make_stats_kernel(n_stage):
    """Tiled stats phase: run `n_stage` affine+ReLU stages on a row tile and
    accumulate per-lane (sum, sumsq) of (y - pilot) into a (2,128) accumulator.

    sc_ref (SMEM f32[2*n_stage+1]): [a_i, c_i]*n_stage, pilot.
    """
    def kernel(sc_ref, x_ref, stat_ref):
        @pl.when(pl.program_id(0) == 0)
        def _init():
            stat_ref[...] = jnp.zeros_like(stat_ref)

        y = x_ref[...]
        for i in range(n_stage):
            y = jnp.maximum(y * sc_ref[2 * i] + sc_ref[2 * i + 1], 0.0)
        d = y - sc_ref[2 * n_stage]
        part = jnp.concatenate(
            [jnp.sum(d, axis=0, keepdims=True),
             jnp.sum(d * d, axis=0, keepdims=True)],
            axis=0)
        stat_ref[...] += part

    return kernel


def _final_kernel(sc_ref, x_ref, o_ref):
    """Tiled final phase: recompute the 3-stage affine+ReLU chain from x and
    apply the BN2 affine.  sc_ref (SMEM f32[8]): a0,c0,a1,c1,a2,c2,scale2,shift2.
    """
    y = x_ref[...]
    for i in range(3):
        y = jnp.maximum(y * sc_ref[2 * i] + sc_ref[2 * i + 1], 0.0)
    o_ref[...] = y * sc_ref[6] + sc_ref[7]


# --------------------------------------------------------------------------
# Helpers
# --------------------------------------------------------------------------
def _vmem_budget(resident_bytes):
    """Request `resident_bytes` + headroom, clamped to physical VMEM - 8 MiB."""
    try:
        cap = int(getattr(pltpu.get_tpu_info(), "vmem_capacity_bytes", 64 << 20))
    except Exception:  # pragma: no cover - defensive
        cap = 64 << 20
    hi = max(cap - (8 << 20), 8 << 20)
    want = int(resident_bytes) + (2 << 20)
    return int(min(max(want, 8 << 20), hi))


def _pack_slab(x_flat, rows):
    """Pack B f32 values into a lane-dense (rows, 128) slab, zero-padded tail."""
    B = x_flat.shape[0]
    padded = rows * LANES
    if padded == B:
        return x_flat.reshape(rows, LANES)
    return jnp.pad(x_flat, (0, padded - B)).reshape(rows, LANES)


def _bn_affine(s, ss, n_f, npad_f, dk_pad, pilot, gamma, beta):
    """Finish a pilot-shifted single-pass BN: returns (scale, shift)."""
    s = s - npad_f * dk_pad
    ss = ss - npad_f * dk_pad * dk_pad
    mean = pilot + s / n_f
    var = jnp.maximum(ss / n_f - (s / n_f) ** 2, 0.0)
    scale = gamma * lax.rsqrt(var + BN_EPS)
    shift = beta - mean * scale
    return scale, shift


# --------------------------------------------------------------------------
# Forward wrapper
# --------------------------------------------------------------------------
def testmodel_forward(x, params, *, force_tiled=False, tile_rows=_DEFAULT_TILE_ROWS):
    """x: (B, 1) or (B,) float32; params: (12,) float32. Returns (B, 1, 1)."""
    B = int(x.shape[0])
    if B == 0:
        return jnp.zeros((0, 1, 1), jnp.float32)

    x_flat = x.reshape(-1).astype(jnp.float32)
    p = params.astype(jnp.float32)

    # Scalar parameter folds (tiny host-side ops).
    a0 = p[0] * p[2]                 # fc1 + conv1 folded
    c0 = p[1] * p[2] + p[3]
    a1, c1 = p[4], p[5]              # layer1.conv
    w2, b2 = p[8], p[9]              # layer2.conv
    g1, be1 = p[6], p[7]             # layer1.bn
    g2, be2 = p[10], p[11]           # layer2.bn
    # Pilot for the single-pass variance: first sample's value after pass 2.
    pilot1 = jnp.maximum(jnp.maximum(x_flat[0] * a0 + c0, 0.0) * a1 + c1, 0.0)
    k1 = jnp.maximum(jnp.maximum(c0, 0.0) * a1 + c1, 0.0)   # value of padded lanes

    rows_min = pl.cdiv(B, LANES)
    use_tiled = force_tiled or (rows_min * LANES * 4 > _SINGLE_BLOCK_MAX_BYTES)

    smem_spec = pl.BlockSpec(memory_space=pltpu.MemorySpace.SMEM)

    if not use_tiled:
        # ---------------- single-block fused path (small / medium B) --------
        rows = rows_min
        padded = rows * LANES
        x_slab = _pack_slab(x_flat, rows)
        slab_bytes = padded * 4

        sc = jnp.stack([a0, c0, a1, c1, w2, b2, g1, be1, g2, be2,
                        jnp.float32(B), jnp.float32(padded - B), pilot1])

        out = pl.pallas_call(
            _fused_kernel,
            out_shape=jax.ShapeDtypeStruct((rows, LANES), jnp.float32),
            in_specs=[smem_spec,
                      pl.BlockSpec(memory_space=pltpu.MemorySpace.VMEM)],
            out_specs=pl.BlockSpec(memory_space=pltpu.MemorySpace.VMEM),
            input_output_aliases={1: 0},                 # x slab -> output slab
            compiler_params=pltpu.CompilerParams(
                vmem_limit_bytes=_vmem_budget(2 * slab_bytes)),
            cost_estimate=pl.CostEstimate(
                flops=20 * padded, transcendentals=2,
                bytes_accessed=2 * slab_bytes),
        )(sc, x_slab)
        return out.reshape(padded)[:B].reshape(B, 1, 1)

    # -------------------- tiled 3-phase path (large B) -----------------------
    rows = ((rows_min + tile_rows - 1) // tile_rows) * tile_rows
    padded = rows * LANES
    n_tiles = rows // tile_rows
    x_slab = _pack_slab(x_flat, rows)
    slab_bytes = padded * 4
    n_f = jnp.float32(B)
    npad_f = jnp.float32(padded - B)

    def stats_call(sc, n_stage):
        return pl.pallas_call(
            _make_stats_kernel(n_stage),
            out_shape=jax.ShapeDtypeStruct((2, LANES), jnp.float32),
            grid=(n_tiles,),
            in_specs=[smem_spec,
                      pl.BlockSpec((tile_rows, LANES), lambda t: (t, 0))],
            out_specs=pl.BlockSpec((2, LANES), lambda t: (0, 0)),
            compiler_params=pltpu.CompilerParams(
                dimension_semantics=("arbitrary",)),
            cost_estimate=pl.CostEstimate(
                flops=(3 * n_stage + 5) * padded, transcendentals=0,
                bytes_accessed=slab_bytes + 1024),
        )(sc, x_slab)

    # Phase A: BN1 stats (recompute 2-stage chain from x, accumulate per tile).
    stA = stats_call(jnp.stack([a0, c0, a1, c1, pilot1]), 2)
    scale1, shift1 = _bn_affine(jnp.sum(stA[0]), jnp.sum(stA[1]),
                                n_f, npad_f, k1 - pilot1, pilot1, g1, be1)
    a2 = scale1 * w2
    c2 = shift1 * w2 + b2
    pilot2 = jnp.maximum(pilot1 * a2 + c2, 0.0)
    k2 = jnp.maximum(k1 * a2 + c2, 0.0)

    # Phase B: BN2 stats (recompute 3-stage chain from x).
    stB = stats_call(jnp.stack([a0, c0, a1, c1, a2, c2, pilot2]), 3)
    scale2, shift2 = _bn_affine(jnp.sum(stB[0]), jnp.sum(stB[1]),
                                n_f, npad_f, k2 - pilot2, pilot2, g2, be2)

    # Phase C: normalize + store; grid-parallel (uses both v7x TensorCores),
    # x tile aliased onto the output tile.
    scC = jnp.stack([a0, c0, a1, c1, a2, c2, scale2, shift2])
    out = pl.pallas_call(
        _final_kernel,
        out_shape=jax.ShapeDtypeStruct((rows, LANES), jnp.float32),
        grid=(n_tiles,),
        in_specs=[smem_spec,
                  pl.BlockSpec((tile_rows, LANES), lambda t: (t, 0))],
        out_specs=pl.BlockSpec((tile_rows, LANES), lambda t: (t, 0)),
        input_output_aliases={1: 0},
        compiler_params=pltpu.CompilerParams(
            dimension_semantics=("parallel",)),
        cost_estimate=pl.CostEstimate(
            flops=11 * padded, transcendentals=0,
            bytes_accessed=2 * slab_bytes),
    )(scC, x_slab)
    return out.reshape(padded)[:B].reshape(B, 1, 1)


# --------------------------------------------------------------------------
# Parameter init + plain-JAX reference
# --------------------------------------------------------------------------
def make_params(key):
    """Deterministic parameter init (shapes from the module __init__)."""
    ks = jax.random.split(key, 8)
    u = lambda k: jax.random.uniform(k, (), jnp.float32, -1.0, 1.0)
    return jnp.array(
        [
            u(ks[0]), u(ks[1]),          # fc1.weight, fc1.bias
            u(ks[2]), u(ks[3]),          # conv1.weight, conv1.bias
            u(ks[4]), u(ks[5]),          # layer1.conv.weight, layer1.conv.bias
            1.0, 0.0,                    # layer1.bn.gamma, layer1.bn.beta
            u(ks[6]), u(ks[7]),          # layer2.layer1.conv.weight, .bias
            1.0, 0.0,                    # layer2.layer1.bn.gamma, .beta
        ],
        dtype=jnp.float32,
    )


def reference_forward(x, p):
    """Plain-JAX reference mirroring the PyTorch forward (train-mode BN)."""
    y = x.reshape(-1).astype(jnp.float32)
    y = y * p[0] + p[1]
    y = y * p[2] + p[3]
    y = jnp.maximum(y, 0.0)
    y = y * p[4] + p[5]
    y = jnp.maximum(y, 0.0)
    m, v = jnp.mean(y), jnp.var(y)
    y = (y - m) / jnp.sqrt(v + BN_EPS) * p[6] + p[7]
    y = y * p[8] + p[9]
    y = jnp.maximum(y, 0.0)
    m, v = jnp.mean(y), jnp.var(y)
    y = (y - m) / jnp.sqrt(v + BN_EPS) * p[10] + p[11]
    return y.reshape(-1, 1, 1)


if __name__ == "__main__":
    key = jax.random.PRNGKey(0)
    k1_, k2_, k3_, kp = jax.random.split(key, 4)
    params = make_params(kp)

    # 1) Small batch (single partially-filled vreg row).
    B = 8
    x = jax.random.normal(k1_, (B, 1), dtype=jnp.float32)
    out = jax.block_until_ready(testmodel_forward(x, params))
    ref = reference_forward(x, params)
    assert out.shape == (B, 1, 1), out.shape
    assert jnp.allclose(out, ref, atol=1e-5, rtol=1e-4), (
        float(jnp.max(jnp.abs(out - ref))))

    # 2) Crosses the 128-lane boundary (exercises the analytic padding fix).
    B2 = 200
    x2 = jax.random.normal(k2_, (B2, 1), dtype=jnp.float32)
    out2 = jax.block_until_ready(testmodel_forward(x2, params))
    ref2 = reference_forward(x2, params)
    assert out2.shape == (B2, 1, 1), out2.shape
    assert jnp.allclose(out2, ref2, atol=1e-5, rtol=1e-4), (
        float(jnp.max(jnp.abs(out2 - ref2))))

    # 3) Exact multiple of 128 (pure-reshape fast path, npad == 0).
    B3 = 256
    x3 = jax.random.normal(k3_, (B3, 1), dtype=jnp.float32)
    out3 = jax.block_until_ready(testmodel_forward(x3, params))
    ref3 = reference_forward(x3, params)
    assert jnp.allclose(out3, ref3, atol=1e-5, rtol=1e-4), (
        float(jnp.max(jnp.abs(out3 - ref3))))

    # 4) Large batch, forced through the tiled 3-phase pipeline.
    B4 = 200_000
    x4 = jax.random.normal(k1_, (B4, 1), dtype=jnp.float32)
    out4 = jax.block_until_ready(testmodel_forward(x4, params, force_tiled=True))
    ref4 = reference_forward(x4, params)
    assert out4.shape == (B4, 1, 1), out4.shape
    assert jnp.allclose(out4, ref4, atol=1e-4, rtol=1e-3), (
        float(jnp.max(jnp.abs(out4 - ref4))))

    print("KERNEL_OK")
</pallas_src>

<mosaic_0001>
module attributes {stable_mosaic.version = 11 : i64} {
  func.func @_fused_kernel(%arg0: memref<13xf32, #tpu.memory_space<smem>>, %arg1: memref<1x128xf32, #tpu.memory_space<vmem>>, %arg2: memref<1x128xf32, #tpu.memory_space<vmem>>) attributes {dimension_semantics = [], scalar_prefetch = 0 : i64, scratch_operands = 0 : i64, tpu.core_type = #tpu.core_type<tc>} {
    %c0 = arith.constant 0 : index
    %0 = memref.load %arg0[%c0] : memref<13xf32, #tpu.memory_space<smem>>
    %c1 = arith.constant 1 : index
    %1 = memref.load %arg0[%c1] : memref<13xf32, #tpu.memory_space<smem>>
    %c2 = arith.constant 2 : index
    %2 = memref.load %arg0[%c2] : memref<13xf32, #tpu.memory_space<smem>>
    %c3 = arith.constant 3 : index
    %3 = memref.load %arg0[%c3] : memref<13xf32, #tpu.memory_space<smem>>
    %c4 = arith.constant 4 : index
    %4 = memref.load %arg0[%c4] : memref<13xf32, #tpu.memory_space<smem>>
    %c5 = arith.constant 5 : index
    %5 = memref.load %arg0[%c5] : memref<13xf32, #tpu.memory_space<smem>>
    %c6 = arith.constant 6 : index
    %6 = memref.load %arg0[%c6] : memref<13xf32, #tpu.memory_space<smem>>
    %c7 = arith.constant 7 : index
    %7 = memref.load %arg0[%c7] : memref<13xf32, #tpu.memory_space<smem>>
    %c8 = arith.constant 8 : index
    %8 = memref.load %arg0[%c8] : memref<13xf32, #tpu.memory_space<smem>>
    %c9 = arith.constant 9 : index
    %9 = memref.load %arg0[%c9] : memref<13xf32, #tpu.memory_space<smem>>
    %c10 = arith.constant 10 : index
    %10 = memref.load %arg0[%c10] : memref<13xf32, #tpu.memory_space<smem>>
    %cst = arith.constant 1.000000e+00 : f32
    %11 = arith.divf %cst, %10 : f32
    %c11 = arith.constant 11 : index
    %12 = memref.load %arg0[%c11] : memref<13xf32, #tpu.memory_space<smem>>
    %c12 = arith.constant 12 : index
    %13 = memref.load %arg0[%c12] : memref<13xf32, #tpu.memory_space<smem>>
    %c0_0 = arith.constant 0 : index
    %c0_1 = arith.constant 0 : index
    %14 = vector.load %arg1[%c0_0, %c0_1] : memref<1x128xf32, #tpu.memory_space<vmem>>, vector<1x128xf32>
    %15 = vector.broadcast %0 : f32 to vector<1x128xf32>
    %16 = arith.mulf %14, %15 : vector<1x128xf32>
    %17 = vector.broadcast %1 : f32 to vector<1x128xf32>
    %18 = arith.addf %16, %17 : vector<1x128xf32>
    %cst_2 = arith.constant 0.000000e+00 : f32
    %19 = vector.broadcast %cst_2 : f32 to vector<1x128xf32>
    %20 = arith.maximumf %18, %19 : vector<1x128xf32>
    %21 = vector.broadcast %2 : f32 to vector<1x128xf32>
    %22 = arith.mulf %20, %21 : vector<1x128xf32>
    %23 = vector.broadcast %3 : f32 to vector<1x128xf32>
    %24 = arith.addf %22, %23 : vector<1x128xf32>
    %cst_3 = arith.constant 0.000000e+00 : f32
    %25 = vector.broadcast %cst_3 : f32 to vector<1x128xf32>
    %26 = arith.maximumf %24, %25 : vector<1x128xf32>
    %c0_4 = arith.constant 0 : index
    %c0_5 = arith.constant 0 : index
    %27 = vector.load %arg2[%c0_4, %c0_5] : memref<1x128xf32, #tpu.memory_space<vmem>>, vector<1x128xf32>
    tpu.vector_store %arg2[%c0_4, %c0_5], %26 {strides = array<i32>} : memref<1x128xf32, #tpu.memory_space<vmem>>, vector<1x128xf32>,
    %c0_6 = arith.constant 0 : index
    %c0_7 = arith.constant 0 : index
    %28 = vector.load %arg2[%c0_6, %c0_7] : memref<1x128xf32, #tpu.memory_space<vmem>>, vector<1x128xf32>
    %29 = vector.broadcast %13 : f32 to vector<1x128xf32>
    %30 = arith.subf %28, %29 : vector<1x128xf32>
    %cst_8 = arith.constant dense<0.000000e+00> : vector<128xf32>
    %31 = vector.multi_reduction <add>, %30, %cst_8 [0] : vector<1x128xf32> to vector<128xf32>
    %32 = vector.shape_cast %31 : vector<128xf32> to vector<1x128xf32>
    %cst_9 = arith.constant dense<0.000000e+00> : vector<1xf32>
    %33 = vector.multi_reduction <add>, %32, %cst_9 [1] : vector<1x128xf32> to vector<1xf32>
    %34 = vector.shape_cast %33 : vector<1xf32> to vector<1x1xf32>
    %35 = vector.extract %34[0, 0] : f32 from vector<1x1xf32>
    %36 = arith.mulf %30, %30 : vector<1x128xf32>
    %cst_10 = arith.constant dense<0.000000e+00> : vector<128xf32>
    %37 = vector.multi_reduction <add>, %36, %cst_10 [0] : vector<1x128xf32> to vector<128xf32>
    %38 = vector.shape_cast %37 : vector<128xf32> to vector<1x128xf32>
    %cst_11 = arith.constant dense<0.000000e+00> : vector<1xf32>
    %39 = vector.multi_reduction <add>, %38, %cst_11 [1] : vector<1x128xf32> to vector<1xf32>
    %40 = vector.shape_cast %39 : vector<1xf32> to vector<1x1xf32>
    %41 = vector.extract %40[0, 0] : f32 from vector<1x1xf32>
    %cst_12 = arith.constant 0.000000e+00 : f32
    %42 = arith.maximumf %1, %cst_12 : f32
    %43 = arith.mulf %42, %2 : f32
    %44 = arith.addf %43, %3 : f32
    %cst_13 = arith.constant 0.000000e+00 : f32
    %45 = arith.maximumf %44, %cst_13 : f32
    %46 = arith.subf %45, %13 : f32
    %47 = arith.mulf %12, %46 : f32
    %48 = arith.subf %35, %47 : f32
    %49 = arith.mulf %12, %46 : f32
    %50 = arith.mulf %49, %46 : f32
    %51 = arith.subf %41, %50 : f32
    %52 = arith.mulf %48, %11 : f32
    %53 = arith.addf %13, %52 : f32
    %54 = arith.mulf %51, %11 : f32
    %55 = arith.mulf %48, %11 : f32
    %56 = arith.mulf %48, %11 : f32
    %57 = arith.mulf %55, %56 : f32
    %58 = arith.subf %54, %57 : f32
    %cst_14 = arith.constant 0.000000e+00 : f32
    %59 = arith.maximumf %58, %cst_14 : f32
    %cst_15 = arith.constant 9.99999974E-6 : f32
    %60 = arith.addf %59, %cst_15 : f32
    %61 = math.rsqrt %60 : f32
    %62 = arith.mulf %6, %61 : f32
    %63 = arith.mulf %53, %62 : f32
    %64 = arith.subf %7, %63 : f32
    %65 = arith.mulf %62, %4 : f32
    %66 = arith.mulf %64, %4 : f32
    %67 = arith.addf %66, %5 : f32
    %68 = arith.mulf %13, %65 : f32
    %69 = arith.addf %68, %67 : f32
    %cst_16 = arith.constant 0.000000e+00 : f32
    %70 = arith.maximumf %69, %cst_16 : f32
    %c0_17 = arith.constant 0 : index
    %c0_18 = arith.constant 0 : index
    %71 = vector.load %arg2[%c0_17, %c0_18] : memref<1x128xf32, #tpu.memory_space<vmem>>, vector<1x128xf32>
    %72 = vector.broadcast %65 : f32 to vector<1x128xf32>
    %73 = arith.mulf %71, %72 : vector<1x128xf32>
    %74 = vector.broadcast %67 : f32 to vector<1x128xf32>
    %75 = arith.addf %73, %74 : vector<1x128xf32>
    %cst_19 = arith.constant 0.000000e+00 : f32
    %76 = vector.broadcast %cst_19 : f32 to vector<1x128xf32>
    %77 = arith.maximumf %75, %76 : vector<1x128xf32>
    %c0_20 = arith.constant 0 : index
    %c0_21 = arith.constant 0 : index
    %78 = vector.load %arg2[%c0_20, %c0_21] : memref<1x128xf32, #tpu.memory_space<vmem>>, vector<1x128xf32>
    tpu.vector_store %arg2[%c0_20, %c0_21], %77 {strides = array<i32>} : memref<1x128xf32, #tpu.memory_space<vmem>>, vector<1x128xf32>,
    %c0_22 = arith.constant 0 : index
    %c0_23 = arith.constant 0 : index
    %79 = vector.load %arg2[%c0_22, %c0_23] : memref<1x128xf32, #tpu.memory_space<vmem>>, vector<1x128xf32>
    %80 = vector.broadcast %70 : f32 to vector<1x128xf32>
    %81 = arith.subf %79, %80 : vector<1x128xf32>
    %cst_24 = arith.constant dense<0.000000e+00> : vector<128xf32>
    %82 = vector.multi_reduction <add>, %81, %cst_24 [0] : vector<1x128xf32> to vector<128xf32>
    %83 = vector.shape_cast %82 : vector<128xf32> to vector<1x128xf32>
    %cst_25 = arith.constant dense<0.000000e+00> : vector<1xf32>
    %84 = vector.multi_reduction <add>, %83, %cst_25 [1] : vector<1x128xf32> to vector<1xf32>
    %85 = vector.shape_cast %84 : vector<1xf32> to vector<1x1xf32>
    %86 = vector.extract %85[0, 0] : f32 from vector<1x1xf32>
    %87 = arith.mulf %81, %81 : vector<1x128xf32>
    %cst_26 = arith.constant dense<0.000000e+00> : vector<128xf32>
    %88 = vector.multi_reduction <add>, %87, %cst_26 [0] : vector<1x128xf32> to vector<128xf32>
    %89 = vector.shape_cast %88 : vector<128xf32> to vector<1x128xf32>
    %cst_27 = arith.constant dense<0.000000e+00> : vector<1xf32>
    %90 = vector.multi_reduction <add>, %89, %cst_27 [1] : vector<1x128xf32> to vector<1xf32>
    %91 = vector.shape_cast %90 : vector<1xf32> to vector<1x1xf32>
    %92 = vector.extract %91[0, 0] : f32 from vector<1x1xf32>
    %93 = arith.mulf %45, %65 : f32
    %94 = arith.addf %93, %67 : f32
    %cst_28 = arith.constant 0.000000e+00 : f32
    %95 = arith.maximumf %94, %cst_28 : f32
    %96 = arith.subf %95, %70 : f32
    %97 = arith.mulf %12, %96 : f32
    %98 = arith.subf %86, %97 : f32
    %99 = arith.mulf %12, %96 : f32
    %100 = arith.mulf %99, %96 : f32
    %101 = arith.subf %92, %100 : f32
    %102 = arith.mulf %98, %11 : f32
    %103 = arith.addf %70, %102 : f32
    %104 = arith.mulf %101, %11 : f32
    %105 = arith.mulf %98, %11 : f32
    %106 = arith.mulf %98, %11 : f32
    %107 = arith.mulf %105, %106 : f32
    %108 = arith.subf %104, %107 : f32
    %cst_29 = arith.constant 0.000000e+00 : f32
    %109 = arith.maximumf %108, %cst_29 : f32
    %cst_30 = arith.constant 9.99999974E-6 : f32
    %110 = arith.addf %109, %cst_30 : f32
    %111 = math.rsqrt %110 : f32
    %112 = arith.mulf %8, %111 : f32
    %113 = arith.mulf %103, %112 : f32
    %114 = arith.subf %9, %113 : f32
    %c0_31 = arith.constant 0 : index
    %c0_32 = arith.constant 0 : index
    %115 = vector.load %arg2[%c0_31, %c0_32] : memref<1x128xf32, #tpu.memory_space<vmem>>, vector<1x128xf32>
    %116 = vector.broadcast %112 : f32 to vector<1x128xf32>
    %117 = arith.mulf %115, %116 : vector<1x128xf32>
    %118 = vector.broadcast %114 : f32 to vector<1x128xf32>
    %119 = arith.addf %117, %118 : vector<1x128xf32>
    %c0_33 = arith.constant 0 : index
    %c0_34 = arith.constant 0 : index
    %120 = vector.load %arg2[%c0_33, %c0_34] : memref<1x128xf32, #tpu.memory_space<vmem>>, vector<1x128xf32>
    tpu.vector_store %arg2[%c0_33, %c0_34], %119 {strides = array<i32>} : memref<1x128xf32, #tpu.memory_space<vmem>>, vector<1x128xf32>,
    return
  }
}

</mosaic_0001>

<llo_original>
// kernel: tpu_custom_call.1
$region0: #{tpu_custom_call.1}
  #allocation0 [shape = 'u32[]', space=smem, size = 0x4, offset = 0x4, fixed_abs, tag = 'smem constant byte address 0x4 - core index']
  #allocation1 [shape = 'u32[144,128]{1,0:T(1,128)}', space=vmem, size = 0x12000, scoped, tag = 'internal scratch']
  %s0 = inlined_call_operand.vmem [shape: f32[13], index: 0, kind: input, shape index: {}]
  %s1 = inlined_call_operand.hbm [shape: f32[1,128], index: 1, kind: input, shape index: {}, may-alias: {1,2}]
  %s2 = inlined_call_operand.hbm [shape: f32[1,128], index: 2, kind: output, shape index: {}, may-alias: {1,2}]
  %s3 = sld [smem:[#allocation0]]
  $region26: #{tpu_custom_call.1} parent=0
    _
  %s5 = ssub.s32 1, %s3
  %s6 = scalar_select 0, %s5, %s3
  $region1: #{tpu_custom_call.1} parent=0
    #allocation2 [shape = 'u8[512]{0}', space=smem, size = 0x200, scoped, tag = 'input window, operand 0, single buffered']
    #allocation3 [shape = 's32[1]{0}', space=sflag, size = 0x4, scoped, tag = 'scoped memory for tpu_custom_call.1']
    #allocation4 [shape = 's32[1]{0}', space=sflag, size = 0x4, scoped, tag = 'scoped memory for tpu_custom_call.1']
    #allocation5 [shape = 's32[1]{0}', space=sflag, size = 0x4, scoped, tag = 'scoped memory for tpu_custom_call.1']
    #allocation6 [shape = 'u8[512]{0}', space=vmem, size = 0x400, scoped, tag = 'input window, operand 1, single buffered']
    #allocation7 [shape = 'u8[512]{0}', space=vmem, size = 0x400, scoped, tag = 'output window, operand 0, single buffered']
    %7 = vsyncpa [#allocation5], 0
    %8 = vsyncpa [#allocation3], 0
    %9 = vsyncpa [#allocation4], 0
    // Predicated region
    $region2: #{tpu_custom_call.1} parent=1 // pred_check
      _
    $region3: #{tpu_custom_call.1} parent=1 // pred_check_branch
      %11 = sbr.rel (0) target = $region5
    $region4: #{tpu_custom_call.1} parent=1 // pred_region
      %s13 = ssub.s32 16, 16
      %14 = vsyncadd [#allocation5], %s13
      %s16 = sshll.u32 %s0, 4
      %s17 = int_to_ptr.vmem [resolvable:$true] %s16
      %19 = dma.vmem_to_smem %s17, 16, [#allocation2], [#allocation5]
    $region5: #{tpu_custom_call.1} parent=1 // pred_fallthru
      _
    // Predicated region
    $region6: #{tpu_custom_call.1} parent=1 // pred_check
      _
    $region7: #{tpu_custom_call.1} parent=1 // pred_check_branch
      %21 = sbr.rel (0) target = $region9
    $region8: #{tpu_custom_call.1} parent=1 // pred_region
      %s23 = ssub.s32 16, 16
      %24 = vsyncadd [#allocation3], %s23
      %s26 = sshll.u32 [#allocation6], 4
      %s27 = int_to_ptr.vmem [resolvable:$true] %s26
      %29 = dma.hbm_to_vmem [thread:$0]  %s1, 16, %s27, [#allocation3]
    $region9: #{tpu_custom_call.1} parent=1 // pred_fallthru
      _
    // Predicated region
    $region10: #{tpu_custom_call.1} parent=1 // pred_check
      _
    $region11: #{tpu_custom_call.1} parent=1 // pred_check_branch
      %31 = sbr.rel (0) target = $region13
    $region12: #{tpu_custom_call.1} parent=1 // pred_region
      %32 = dma.done [#allocation5], 16
    $region13: #{tpu_custom_call.1} parent=1 // pred_fallthru
      _
    // Predicated region
    $region14: #{tpu_custom_call.1} parent=1 // pred_check
      _
    $region15: #{tpu_custom_call.1} parent=1 // pred_check_branch
      %34 = sbr.rel (0) target = $region17
    $region16: #{tpu_custom_call.1} parent=1 // pred_region
      %35 = dma.done [#allocation3], 16
    $region17: #{tpu_custom_call.1} parent=1 // pred_fallthru
      _
    %36 = sfence
    %s37 = sld [smem:[#allocation2]]
    %s38 = sld [smem:[#allocation2 + $0x1]]
    %s39 = sld [smem:[#allocation2 + $0x2]]
    %s40 = sld [smem:[#allocation2 + $0x3]]
    %s41 = sld [smem:[#allocation2 + $0x4]]
    %s42 = sld [smem:[#allocation2 + $0x5]]
    %s43 = sld [smem:[#allocation2 + $0x6]]
    %s44 = sld [smem:[#allocation2 + $0x7]]
    %s45 = sld [smem:[#allocation2 + $0x8]]
    %s46 = sld [smem:[#allocation2 + $0x9]]
    %s47 = sld [smem:[#allocation2 + $0xa]]
    %v48 = vstv %s47
    %v49 = vrcp.pop %v48
    %s50 = vtos %v49
    %s51 = sld [smem:[#allocation2 + $0xb]]
    %s52 = sld [smem:[#allocation2 + $0xc]]
    %v53 = vld [vmem:[#allocation6] sm:$0x1]
    %v54 = vstv %s37
    %v55 = vmul.f32 %v53, %v54
    %v56 = vstv %s38
    %v57 = vadd.f32 %v55, %v56
    %v58 = vmax.f32 %v57, 0.0
    %v59 = vstv %s39
    %v60 = vmul.f32 %v58, %v59
    %v61 = vstv %s40
    %v62 = vadd.f32 %v60, %v61
    %v63 = vmax.f32 %v62, 0.0
    %64 = vst [vmem:[#allocation7] sm:$0x1] %v63
    %v65 = vld [vmem:[#allocation7] sm:$0x1]
    %v66 = vstv %s52
    %v67 = vsub.f32 %v65, %v66
    %v68 = vadd.f32 %v67, 0.0
    %vm69 = vcmask 1040384
    %v70 = vsel %vm69, %v68, 0.0
    %71 = vadd.xlane.f32.xlu0 %v70
    %v72 = vpop.xlane.xlu0 %71
    %s73 = vtos %v72
    %v74 = vmul.f32 %v67, %v67
    %v75 = vadd.f32 %v74, 0.0
    %v76 = vsel %vm69, %v75, 0.0
    %77 = vadd.xlane.f32.xlu0 %v76
    %v78 = vpop.xlane.xlu0 %77
    %s79 = vtos %v78
    %s80 = smax.f32 %s38, 0.0
    %s81 = smul.f32 %s80, %s39
    %s82 = sadd.f32 %s81, %s40
    %s83 = smax.f32 %s82, 0.0
    %s84 = ssub.f32 %s83, %s52
    %s85 = smul.f32 %s51, %s84
    %s86 = ssub.f32 %s73, %s85
    %s87 = smul.f32 %s85, %s84
    %s88 = ssub.f32 %s79, %s87
    %s89 = smul.f32 %s86, %s50
    %s90 = sadd.f32 %s52, %s89
    %s91 = smul.f32 %s88, %s50
    %s92 = smul.f32 %s89, %s89
    %s93 = ssub.f32 %s91, %s92
    %s94 = smax.f32 %s93, 0.0
    %s95 = sadd.f32 %s94, 1e-05
    %v96 = vstv %s95
    %v97 = vrsqrt.pop %v96
    %s98 = vtos %v97
    %s99 = smul.f32 %s43, %s98
    %s100 = smul.f32 %s90, %s99
    %s101 = ssub.f32 %s44, %s100
    %s102 = smul.f32 %s99, %s41
    %s103 = smul.f32 %s101, %s41
    %s104 = sadd.f32 %s103, %s42
    %s105 = smul.f32 %s52, %s102
    %s106 = sadd.f32 %s105, %s104
    %s107 = smax.f32 %s106, 0.0
    %v108 = vstv %s102
    %v109 = vmul.f32 %v65, %v108
    %v110 = vstv %s104
    %v111 = vadd.f32 %v109, %v110
    %v112 = vmax.f32 %v111, 0.0
    %113 = vst [vmem:[#allocation7] sm:$0x1] %v112
    %v114 = vld [vmem:[#allocation7] sm:$0x1]
    %v115 = vstv %s107
    %v116 = vsub.f32 %v114, %v115
    %v117 = vadd.f32 %v116, 0.0
    %v118 = vsel %vm69, %v117, 0.0
    %119 = vadd.xlane.f32.xlu0 %v118
    %v120 = vpop.xlane.xlu0 %119
    %s121 = vtos %v120
    %v122 = vmul.f32 %v116, %v116
    %v123 = vadd.f32 %v122, 0.0
    %v124 = vsel %vm69, %v123, 0.0
    %125 = vadd.xlane.f32.xlu0 %v124
    %v126 = vpop.xlane.xlu0 %125
    %s127 = vtos %v126
    %s128 = smul.f32 %s83, %s102
    %s129 = sadd.f32 %s128, %s104
    %s130 = smax.f32 %s129, 0.0
    %s131 = ssub.f32 %s130, %s107
    %s132 = smul.f32 %s51, %s131
    %s133 = ssub.f32 %s121, %s132
    %s134 = smul.f32 %s132, %s131
    %s135 = ssub.f32 %s127, %s134
    %s136 = smul.f32 %s133, %s50
    %s137 = sadd.f32 %s107, %s136
    %s138 = smul.f32 %s135, %s50
    %s139 = smul.f32 %s136, %s136
    %s140 = ssub.f32 %s138, %s139
    %s141 = smax.f32 %s140, 0.0
    %s142 = sadd.f32 %s141, 1e-05
    %v143 = vstv %s142
    %v144 = vrsqrt.pop %v143
    %s145 = vtos %v144
    %s146 = smul.f32 %s45, %s145
    %s147 = smul.f32 %s137, %s146
    %s148 = ssub.f32 %s46, %s147
    %v149 = vstv %s146
    %v150 = vmul.f32 %v114, %v149
    %v151 = vstv %s148
    %v152 = vadd.f32 %v150, %v151
    %153 = vst [vmem:[#allocation7] sm:$0x1] %v152
    // Predicated region
    $region18: #{tpu_custom_call.1} parent=1 // pred_check
      _
    $region19: #{tpu_custom_call.1} parent=1 // pred_check_branch
      %155 = sbr.rel (0) target = $region21
    $region20: #{tpu_custom_call.1} parent=1 // pred_region
      %s157 = ssub.s32 16, 16
      %158 = vsyncadd [#allocation4], %s157
      %s160 = sshll.u32 [#allocation7], 4
      %s161 = int_to_ptr.vmem [resolvable:$true] %s160
      %163 = dma.vmem_to_hbm [thread:$0]  %s161, 16, %s2, [#allocation4]
    $region21: #{tpu_custom_call.1} parent=1 // pred_fallthru
      _
    // Predicated region
    $region22: #{tpu_custom_call.1} parent=1 // pred_check
      _
    $region23: #{tpu_custom_call.1} parent=1 // pred_check_branch
      %165 = sbr.rel (0) target = $region25
    $region24: #{tpu_custom_call.1} parent=1 // pred_region
      %166 = dma.done [#allocation4], 16
    $region25: #{tpu_custom_call.1} parent=1 // pred_fallthru
      _
    %167 = vsyncpa [#allocation3], 1
    %168 = vsyncpa [#allocation4], 1
    %169 = vsyncpa [#allocation5], 1

</llo_original>
